<compile_context>
chip_gen: v7x
topology: tpu7x:2x2x1
jax: 0.10.0
libtpu: 0.0.40
codegen_flags: <defaults>
</compile_context>

<pallas_src>
import functools

import jax
import jax.numpy as jnp
import numpy as np
from jax.experimental import pallas as pl
from jax.experimental.pallas import tpu as pltpu


def _round_up(n, m):
    return ((n + m - 1) // m) * m


def _vmem_cap_bytes():
    """Generation-aware upper bound for the raised scoped-VMEM limit."""
    phys = 0
    try:
        info = pltpu.get_tpu_info()
        phys = int(getattr(info, "vmem_capacity_bytes", 0) or 0)
    except Exception:
        phys = 0
    if not phys:
        phys = 64 << 20            # unknown chip: assume the smallest (v7x-like)
    if phys <= (64 << 20):         # v7x: 64 MiB physical per TensorCore
        return 48 << 20
    return 100 << 20               # v5e / v6e: 128 MiB physical


def _sine_layer_kernel(x_ref, w_ref, b_ref, o_ref, *, omega_0):
    # x_ref: (TM, in_p), w_ref: (in_p, out_p)  [resident across grid steps],
    # b_ref: (1, out_p), o_ref: (TM, out_p).
    z = jnp.dot(x_ref[...], w_ref[...], preferred_element_type=jnp.float32)
    z = z + b_ref[...]                          # bias-add in f32
    o_ref[...] = jnp.sin(omega_0 * z).astype(o_ref.dtype)


def _sine_layer_call(kernel, *, B_p, tile_m, in_p, out_p, out_dtype,
                     compiler_params, cost, single_buffer_resident):
    resident = {}
    if single_buffer_resident and hasattr(pl, "Buffered"):
        # Grid-invariant operands: one resident VMEM copy instead of the
        # pipeline's default double buffer.
        resident = {"pipeline_mode": pl.Buffered(1)}
    return pl.pallas_call(
        kernel,
        out_shape=jax.ShapeDtypeStruct((B_p, out_p), out_dtype),
        grid_spec=pltpu.PrefetchScalarGridSpec(
            num_scalar_prefetch=0,
            grid=(B_p // tile_m,),
            in_specs=[
                pl.BlockSpec((tile_m, in_p), lambda i: (i, 0)),
                pl.BlockSpec((in_p, out_p), lambda i: (0, 0), **resident),
                pl.BlockSpec((1, out_p), lambda i: (0, 0), **resident),
            ],
            out_specs=pl.BlockSpec((tile_m, out_p), lambda i: (i, 0)),
        ),
        compiler_params=compiler_params,
        cost_estimate=cost,
    )


def sine_layer_forward(x, weight, bias, omega_0=30.0, *, tile_m=None,
                       compute_dtype=None):
    """x: (B, in_features); weight: (out_features, in_features); bias: (out_features,).

    compute_dtype: optional dtype (e.g. jnp.bfloat16) for the x / W matmul
    operands; accumulation, bias-add and sin stay in f32. Default keeps x.dtype.
    """
    B, in_features = x.shape
    out_features = weight.shape[0]
    out_dtype = x.dtype
    cdt = jnp.dtype(compute_dtype) if compute_dtype is not None else jnp.dtype(x.dtype)

    # ---- lane-dense feature padding targets (multiples of 128) -------------
    in_p = _round_up(in_features, 128)
    out_p = _round_up(out_features, 128)

    # ---- batch tiling -------------------------------------------------------
    if tile_m is None:
        # HBM-bound: big tiles amortize the ~0.35 us per-grid-step overhead.
        tile_m = 2048 if max(in_p, out_p) <= 512 else 1024
    tile_m = max(8, _round_up(int(tile_m), 8))      # (8,128) sublane rule
    B8 = _round_up(B, 8)
    tile_m = min(tile_m, B8)                        # never exceed the batch
    if B8 >= 256:
        # v7x has 2 TensorCores: keep >= 2 grid steps on the "parallel" axis.
        tile_m = min(tile_m, _round_up(pl.cdiv(B8, 2), 8))
    B_p = _round_up(B, tile_m)

    # ---- layout glue: skip the pad HBM passes when already aligned ----------
    needs_pad = (in_p != in_features) or (out_p != out_features) or (B_p != B)
    if needs_pad:
        x_p = jnp.zeros((B_p, in_p), cdt).at[:B, :in_features].set(x.astype(cdt))
        w_t = jnp.zeros((in_p, out_p), cdt).at[:in_features, :out_features].set(
            weight.T.astype(cdt))
        b2d = jnp.zeros((1, out_p), jnp.float32).at[0, :out_features].set(
            bias.astype(jnp.float32))
    else:
        # Fast path: no extra pad/slice passes over the (large) activations.
        x_p = x if cdt == x.dtype else x.astype(cdt)
        w_t = weight.T.astype(cdt)                  # small (in x out) transpose only
        b2d = bias.reshape(1, out_p).astype(jnp.float32)

    kernel = functools.partial(_sine_layer_kernel, omega_0=float(omega_0))

    # ---- scheduler hint ------------------------------------------------------
    in_bytes = cdt.itemsize
    out_bytes = jnp.dtype(out_dtype).itemsize
    cost = pl.CostEstimate(
        flops=2 * B_p * in_p * out_p,
        transcendentals=B_p * out_p,
        bytes_accessed=(B_p * in_p + in_p * out_p) * in_bytes
        + out_p * 4
        + B_p * out_p * out_bytes,
    )

    # ---- VMEM budget: assume double-buffered weight (worst case) + headroom --
    vmem_needed = (2 * tile_m * in_p * in_bytes          # x tiles (2 bufs)
                   + 2 * tile_m * out_p * out_bytes      # out tiles (2 bufs)
                   + 2 * (in_p * out_p * in_bytes        # weight (<=2 bufs)
                          + out_p * 4))                  # bias
    # Always set an explicit limit (v5e's default scoped VMEM is only 16 MiB),
    # capped per generation (48 MiB on v7x, 100 MiB on v5e/v6e).
    vmem_limit = int(min(_vmem_cap_bytes(), max(int(1.5 * vmem_needed), 32 << 20)))
    compiler_params = pltpu.CompilerParams(
        dimension_semantics=("parallel",),
        vmem_limit_bytes=vmem_limit,
    )

    call_kwargs = dict(B_p=B_p, tile_m=tile_m, in_p=in_p, out_p=out_p,
                       out_dtype=out_dtype, compiler_params=compiler_params,
                       cost=cost)
    try:
        out = _sine_layer_call(kernel, single_buffer_resident=True,
                               **call_kwargs)(x_p, w_t, b2d)
    except Exception:
        # Older JAX without pipeline_mode / Buffered(1) support on BlockSpec.
        out = _sine_layer_call(kernel, single_buffer_resident=False,
                               **call_kwargs)(x_p, w_t, b2d)

    if needs_pad:
        out = out[:B, :out_features]
    return out


def init_sine_layer_params(key, in_features, out_features, is_first=False,
                           omega_0=30.0):
    """SIREN init matching SineLayer.init_weights + default nn.Linear bias init."""
    kw, kb = jax.random.split(key)
    if is_first:
        bound = 1.0 / in_features
    else:
        bound = np.sqrt(6.0 / in_features) / omega_0
    weight = jax.random.uniform(
        kw, (out_features, in_features), jnp.float32, -bound, bound)
    b_bound = 1.0 / np.sqrt(in_features)
    bias = jax.random.uniform(
        kb, (out_features,), jnp.float32, -b_bound, b_bound)
    return weight, bias


if __name__ == "__main__":
    key = jax.random.PRNGKey(0)
    k_x1, k_x2, k_p1, k_p2 = jax.random.split(key, 4)
    omega_0 = 30.0

    # Case 1: small, unaligned, ragged batch -> exercises the padding path.
    in_f, out_f = 32, 32
    w1, b1 = init_sine_layer_params(k_p1, in_f, out_f, is_first=True,
                                    omega_0=omega_0)
    x1 = jax.random.normal(k_x1, (37, in_f), jnp.float32)
    out1 = jax.block_until_ready(
        sine_layer_forward(x1, w1, b1, omega_0=omega_0))
    ref1 = jnp.sin(omega_0 * (x1 @ w1.T + b1))
    np.testing.assert_allclose(np.asarray(out1), np.asarray(ref1),
                               atol=1e-4, rtol=1e-4)

    # Case 2: 128-aligned features, batch a multiple of the tile -> fast path
    # (no wrapper pad/slice HBM passes), grid splits into >= 2 steps.
    in_f2, out_f2 = 128, 128
    w2, b2 = init_sine_layer_params(k_p2, in_f2, out_f2, is_first=False,
                                    omega_0=omega_0)
    x2 = jax.random.normal(k_x2, (256, in_f2), jnp.float32)
    out2 = jax.block_until_ready(
        sine_layer_forward(x2, w2, b2, omega_0=omega_0))
    ref2 = jnp.sin(omega_0 * (x2 @ w2.T + b2))
    np.testing.assert_allclose(np.asarray(out2), np.asarray(ref2),
                               atol=1e-4, rtol=1e-4)

    print("KERNEL_OK")
</pallas_src>

<mosaic_0001>
module attributes {stable_mosaic.version = 11 : i64} {
  func.func @_sine_layer_kernel(%arg0: i32, %arg1: memref<40x128xf32, #tpu.memory_space<vmem>>, %arg2: memref<128x128xf32, #tpu.memory_space<vmem>>, %arg3: memref<1x128xf32, #tpu.memory_space<vmem>>, %arg4: memref<40x128xf32, #tpu.memory_space<vmem>>) attributes {dimension_semantics = [#tpu.dimension_semantics<parallel>], iteration_bounds = array<i64: 1>, scalar_prefetch = 0 : i64, scratch_operands = 0 : i64, tpu.core_type = #tpu.core_type<tc>, window_params = [{transform_indices = @transform_0, window_bounds = array<i64: 40, 128>}, {pipeline_mode = #tpu.pipeline_mode<synchronous>, transform_indices = @transform_1, window_bounds = array<i64: 128, 128>}, {pipeline_mode = #tpu.pipeline_mode<synchronous>, transform_indices = @transform_2, window_bounds = array<i64: 1, 128>}, {transform_indices = @transform_3, window_bounds = array<i64: 40, 128>}]} {
    %c0 = arith.constant 0 : index
    %c0_0 = arith.constant 0 : index
    %0 = vector.load %arg1[%c0, %c0_0] : memref<40x128xf32, #tpu.memory_space<vmem>>, vector<40x128xf32>
    %c0_1 = arith.constant 0 : index
    %c0_2 = arith.constant 0 : index
    %1 = vector.load %arg2[%c0_1, %c0_2] : memref<128x128xf32, #tpu.memory_space<vmem>>, vector<128x128xf32>
    %cst = arith.constant dense<0.000000e+00> : vector<40x128xf32>
    %2 = tpu.matmul %0, %1, %cst {dimension_numbers = #tpu.dot_dimension_numbers<[1], [0], [0], [1], [0, 0, 1, 1], [], []>} : vector<40x128xf32>, vector<128x128xf32>, vector<40x128xf32> -> vector<40x128xf32>
    %c0_3 = arith.constant 0 : index
    %c0_4 = arith.constant 0 : index
    %3 = vector.load %arg3[%c0_3, %c0_4] : memref<1x128xf32, #tpu.memory_space<vmem>>, vector<1x128xf32>
    %4 = vector.broadcast %3 : vector<1x128xf32> to vector<40x128xf32>
    %5 = arith.addf %2, %4 : vector<40x128xf32>
    %cst_5 = arith.constant 3.000000e+01 : f32
    %6 = vector.broadcast %cst_5 : f32 to vector<40x128xf32>
    %7 = arith.mulf %6, %5 : vector<40x128xf32>
    %8 = math.sin %7 : vector<40x128xf32>
    %c0_6 = arith.constant 0 : index
    %c0_7 = arith.constant 0 : index
    %9 = vector.load %arg4[%c0_6, %c0_7] : memref<40x128xf32, #tpu.memory_space<vmem>>, vector<40x128xf32>
    tpu.vector_store %arg4[%c0_6, %c0_7], %8 {strides = array<i32>} : memref<40x128xf32, #tpu.memory_space<vmem>>, vector<40x128xf32>,
    return
  }
  func.func @transform_0(%arg0: i32) -> (i32, i32) {
    %c0_i32 = arith.constant 0 : i32
    %c0_i32_0 = arith.constant 0 : i32
    return %arg0, %c0_i32 : i32, i32
  }
  func.func @transform_1(%arg0: i32) -> (i32, i32) {
    %c0_i32 = arith.constant 0 : i32
    %c0_i32_0 = arith.constant 0 : i32
    %c0_i32_1 = arith.constant 0 : i32
    return %c0_i32, %c0_i32_0 : i32, i32
  }
  func.func @transform_2(%arg0: i32) -> (i32, i32) {
    %c0_i32 = arith.constant 0 : i32
    %c0_i32_0 = arith.constant 0 : i32
    %c0_i32_1 = arith.constant 0 : i32
    return %c0_i32, %c0_i32_0 : i32, i32
  }
  func.func @transform_3(%arg0: i32) -> (i32, i32) {
    %c0_i32 = arith.constant 0 : i32
    %c0_i32_0 = arith.constant 0 : i32
    return %arg0, %c0_i32 : i32, i32
  }
}

module attributes {stable_mosaic.version = 11 : i64} {
  func.func @_sine_layer_kernel(%arg0: i32, %arg1: memref<40x128xf32, #tpu.memory_space<vmem>>, %arg2: memref<128x128xf32, #tpu.memory_space<vmem>>, %arg3: memref<1x128xf32, #tpu.memory_space<vmem>>, %arg4: memref<40x128xf32, #tpu.memory_space<vmem>>) attributes {dimension_semantics = [#tpu.dimension_semantics<parallel>], iteration_bounds = array<i64: 1>, scalar_prefetch = 0 : i64, scratch_operands = 0 : i64, tpu.core_type = #tpu.core_type<tc>, window_params = [{transform_indices = @transform_0, window_bounds = array<i64: 40, 128>}, {pipeline_mode = #tpu.pipeline_mode<synchronous>, transform_indices = @transform_1, window_bounds = array<i64: 128, 128>}, {pipeline_mode = #tpu.pipeline_mode<synchronous>, transform_indices = @transform_2, window_bounds = array<i64: 1, 128>}, {transform_indices = @transform_3, window_bounds = array<i64: 40, 128>}]} {
    %c0 = arith.constant 0 : index
    %c0_0 = arith.constant 0 : index
    %0 = vector.load %arg1[%c0, %c0_0] : memref<40x128xf32, #tpu.memory_space<vmem>>, vector<40x128xf32>
    %c0_1 = arith.constant 0 : index
    %c0_2 = arith.constant 0 : index
    %1 = vector.load %arg2[%c0_1, %c0_2] : memref<128x128xf32, #tpu.memory_space<vmem>>, vector<128x128xf32>
    %cst = arith.constant dense<0.000000e+00> : vector<40x128xf32>
    %2 = tpu.matmul %0, %1, %cst {dimension_numbers = #tpu.dot_dimension_numbers<[1], [0], [0], [1], [0, 0, 1, 1], [], []>} : vector<40x128xf32>, vector<128x128xf32>, vector<40x128xf32> -> vector<40x128xf32>
    %c0_3 = arith.constant 0 : index
    %c0_4 = arith.constant 0 : index
    %3 = vector.load %arg3[%c0_3, %c0_4] : memref<1x128xf32, #tpu.memory_space<vmem>>, vector<1x128xf32>
    %4 = vector.broadcast %3 : vector<1x128xf32> to vector<40x128xf32>
    %5 = arith.addf %2, %4 : vector<40x128xf32>
    %cst_5 = arith.constant 3.000000e+01 : f32
    %6 = vector.broadcast %cst_5 : f32 to vector<40x128xf32>
    %7 = arith.mulf %6, %5 : vector<40x128xf32>
    %8 = math.sin %7 : vector<40x128xf32>
    %c0_6 = arith.constant 0 : index
    %c0_7 = arith.constant 0 : index
    %9 = vector.load %arg4[%c0_6, %c0_7] : memref<40x128xf32, #tpu.memory_space<vmem>>, vector<40x128xf32>
    tpu.vector_store %arg4[%c0_6, %c0_7], %8 {strides = array<i32>} : memref<40x128xf32, #tpu.memory_space<vmem>>, vector<40x128xf32>,
    return
  }
  func.func @transform_0(%arg0: i32) -> (i32, i32) {
    %c0_i32 = arith.constant 0 : i32
    %c0_i32_0 = arith.constant 0 : i32
    return %arg0, %c0_i32 : i32, i32
  }
  func.func @transform_1(%arg0: i32) -> (i32, i32) {
    %c0_i32 = arith.constant 0 : i32
    %c0_i32_0 = arith.constant 0 : i32
    %c0_i32_1 = arith.constant 0 : i32
    return %c0_i32, %c0_i32_0 : i32, i32
  }
  func.func @transform_2(%arg0: i32) -> (i32, i32) {
    %c0_i32 = arith.constant 0 : i32
    %c0_i32_0 = arith.constant 0 : i32
    %c0_i32_1 = arith.constant 0 : i32
    return %c0_i32, %c0_i32_0 : i32, i32
  }
  func.func @transform_3(%arg0: i32) -> (i32, i32) {
    %c0_i32 = arith.constant 0 : i32
    %c0_i32_0 = arith.constant 0 : i32
    return %arg0, %c0_i32 : i32, i32
  }
}

</mosaic_0001>

<llo_original>
// kernel: tpu_custom_call.1
$region0: #{tpu_custom_call.1}
  #allocation0 [shape = 'u32[]', space=smem, size = 0x4, offset = 0x4, fixed_abs, tag = 'smem constant byte address 0x4 - core index']
  #allocation1 [shape = 'u32[144,128]{1,0:T(1,128)}', space=vmem, size = 0x12000, scoped, tag = 'internal scratch']
  %s0 = inlined_call_operand.hbm [shape: f32[40,128], index: 0, kind: input, shape index: {}]
  %s1 = inlined_call_operand.hbm [shape: f32[128,128], index: 1, kind: input, shape index: {}]
  %s2 = inlined_call_operand.vmem [shape: f32[1,128], index: 2, kind: input, shape index: {}]
  %s3 = inlined_call_operand.hbm [shape: f32[40,128], index: 3, kind: output, shape index: {}]
  %s4 = sld [smem:[#allocation0]]
  $region30: #{tpu_custom_call.1} parent=0
    _
  %s6 = ssub.s32 1, %s4
  %s7 = scalar_select 0, %s6, %s4
  $region1: #{tpu_custom_call.1} parent=0
    #allocation2 [shape = 'u8[20480]{0}', space=vmem, size = 0x5000, scoped, tag = 'input window, operand 0, single buffered']
    #allocation3 [shape = 's32[1]{0}', space=sflag, size = 0x4, scoped, tag = 'scoped memory for tpu_custom_call.1']
    #allocation4 [shape = 's32[1]{0}', space=sflag, size = 0x4, scoped, tag = 'scoped memory for tpu_custom_call.1']
    #allocation5 [shape = 'u8[65536]{0}', space=vmem, size = 0x10000, scoped, tag = 'input window, operand 1, single buffered']
    #allocation6 [shape = 's32[1]{0}', space=sflag, size = 0x4, scoped, tag = 'scoped memory for tpu_custom_call.1']
    #allocation7 [shape = 'u8[20480]{0}', space=vmem, size = 0x5000, scoped, tag = 'output window, operand 0, single buffered']
    %8 = vsyncpa [#allocation3], 0
    %9 = vsyncpa [#allocation6], 0
    %10 = vsyncpa [#allocation4], 0
    // Predicated region
    $region2: #{tpu_custom_call.1} parent=1 // pred_check
      _
    $region3: #{tpu_custom_call.1} parent=1 // pred_check_branch
      %12 = sbr.rel (0) target = $region5
    $region4: #{tpu_custom_call.1} parent=1 // pred_region
      %s14 = ssub.s32 640, 640
      %15 = vsyncadd [#allocation3], %s14
      %s16 = sshll.u32 [#allocation2], 4
      %s17 = int_to_ptr.vmem [resolvable:$true] %s16
      %22 = dma.hbm_to_vmem [thread:$0]  %s0, 640, %s17, [#allocation3], 128, 128, 8
    $region5: #{tpu_custom_call.1} parent=1 // pred_fallthru
      _
    // Predicated region
    $region6: #{tpu_custom_call.1} parent=1 // pred_check
      _
    $region7: #{tpu_custom_call.1} parent=1 // pred_check_branch
      %24 = sbr.rel (0) target = $region9
    $region8: #{tpu_custom_call.1} parent=1 // pred_region
      %s26 = ssub.s32 2048, 2048
      %27 = vsyncadd [#allocation6], %s26
      %s28 = sshll.u32 [#allocation5], 4
      %s29 = int_to_ptr.vmem [resolvable:$true] %s28
      %34 = dma.hbm_to_vmem [thread:$0]  %s1, 2048, %s29, [#allocation6], 128, 128, 8
    $region9: #{tpu_custom_call.1} parent=1 // pred_fallthru
      _
    // Predicated region
    $region10: #{tpu_custom_call.1} parent=1 // pred_check
      _
    $region11: #{tpu_custom_call.1} parent=1 // pred_check_branch
      %36 = sbr.rel (0) target = $region13
    $region12: #{tpu_custom_call.1} parent=1 // pred_region
      _
    $region13: #{tpu_custom_call.1} parent=1 // pred_fallthru
      _
    // Predicated region
    $region14: #{tpu_custom_call.1} parent=1 // pred_check
      _
    $region15: #{tpu_custom_call.1} parent=1 // pred_check_branch
      %38 = sbr.rel (0) target = $region17
    $region16: #{tpu_custom_call.1} parent=1 // pred_region
      %39 = dma.done [#allocation3], 640
    $region17: #{tpu_custom_call.1} parent=1 // pred_fallthru
      _
    // Predicated region
    $region18: #{tpu_custom_call.1} parent=1 // pred_check
      _
    $region19: #{tpu_custom_call.1} parent=1 // pred_check_branch
      %41 = sbr.rel (0) target = $region21
    $region20: #{tpu_custom_call.1} parent=1 // pred_region
      %42 = dma.done [#allocation6], 2048
    $region21: #{tpu_custom_call.1} parent=1 // pred_fallthru
      _
    %v43 = vld [vmem:[#allocation2] sm:$0xff]
    %v44 = vld [vmem:[#allocation2 + $0x8] sm:$0xff]
    %v45 = vld [vmem:[#allocation2 + $0x10] sm:$0xff]
    %v46 = vld [vmem:[#allocation2 + $0x18] sm:$0xff]
    %v47 = vld [vmem:[#allocation2 + $0x20] sm:$0xff]
    %v48 = vld [vmem:[#allocation5] sm:$0xff]
    %v49 = vld [vmem:[#allocation5 + $0x8] sm:$0xff]
    %v50 = vld [vmem:[#allocation5 + $0x10] sm:$0xff]
    %v51 = vld [vmem:[#allocation5 + $0x18] sm:$0xff]
    %v52 = vld [vmem:[#allocation5 + $0x20] sm:$0xff]
    %v53 = vld [vmem:[#allocation5 + $0x28] sm:$0xff]
    %v54 = vld [vmem:[#allocation5 + $0x30] sm:$0xff]
    %v55 = vld [vmem:[#allocation5 + $0x38] sm:$0xff]
    %v56 = vld [vmem:[#allocation5 + $0x40] sm:$0xff]
    %v57 = vld [vmem:[#allocation5 + $0x48] sm:$0xff]
    %v58 = vld [vmem:[#allocation5 + $0x50] sm:$0xff]
    %v59 = vld [vmem:[#allocation5 + $0x58] sm:$0xff]
    %v60 = vld [vmem:[#allocation5 + $0x60] sm:$0xff]
    %v61 = vld [vmem:[#allocation5 + $0x68] sm:$0xff]
    %v62 = vld [vmem:[#allocation5 + $0x70] sm:$0xff]
    %v63 = vld [vmem:[#allocation5 + $0x78] sm:$0xff]
    %v64 = vld [vmem:[%s2] sm:$0x1]
    %v66 = vlaneseq
    %v67 = vshrl.u32 %v66, 7
    %v68 = vsub.s32 0, %v67
    %v69 = vrot.slane %v64, %v68
    %71 = vmatprep.subr.mxu0 0.0
    %72 = vmatpush1.msra.mxu0 %v48
    %73 = vmatprep.subr.mxu0 0.0
    %74 = vmatpush1.msra.mxu0 %v49
    %75 = vmatprep.subr.mxu0 0.0
    %76 = vmatpush1.msra.mxu0 %v50
    %77 = vmatprep.subr.mxu0 0.0
    %78 = vmatpush1.msra.mxu0 %v51
    %79 = vmatprep.subr.mxu0 0.0
    %80 = vmatpush1.msra.mxu0 %v52
    %81 = vmatprep.subr.mxu0 0.0
    %82 = vmatpush1.msra.mxu0 %v53
    %83 = vmatprep.subr.mxu0 0.0
    %84 = vmatpush1.msra.mxu0 %v54
    %85 = vmatprep.subr.mxu0 0.0
    %86 = vmatpush1.msra.mxu0 %v55
    %87 = vmatprep.subr.mxu0 0.0
    %88 = vmatpush1.msra.mxu0 %v56
    %89 = vmatprep.subr.mxu0 0.0
    %90 = vmatpush1.msra.mxu0 %v57
    %91 = vmatprep.subr.mxu0 0.0
    %92 = vmatpush1.msra.mxu0 %v58
    %93 = vmatprep.subr.mxu0 0.0
    %94 = vmatpush1.msra.mxu0 %v59
    %95 = vmatprep.subr.mxu0 0.0
    %96 = vmatpush1.msra.mxu0 %v60
    %97 = vmatprep.subr.mxu0 0.0
    %98 = vmatpush1.msra.mxu0 %v61
    %99 = vmatprep.subr.mxu0 0.0
    %100 = vmatpush1.msra.mxu0 %v62
    %101 = vmatprep.subr.mxu0 0.0
    %102 = vmatpush1.msra.mxu0 %v63
    %103 = vmatprep.subr.mxu0 0.0
    %104 = vmatpush1.msra.mxu0 0.0
    %105 = vmatprep.subr.mxu0 0.0
    %106 = vmatpush1.msra.mxu0 0.0
    %107 = vmatprep.subr.mxu0 0.0
    %108 = vmatpush1.msra.mxu0 0.0
    %109 = vmatprep.subr.mxu0 0.0
    %110 = vmatpush1.msra.mxu0 0.0
    %111 = vmatprep.subr.mxu0 0.0
    %112 = vmatpush1.msra.mxu0 0.0
    %113 = vmatprep.subr.mxu0 0.0
    %114 = vmatpush1.msra.mxu0 0.0
    %115 = vmatprep.subr.mxu0 0.0
    %116 = vmatpush1.msra.mxu0 0.0
    %117 = vmatprep.subr.mxu0 0.0
    %118 = vmatpush1.msra.mxu0 0.0
    %119 = vmatprep.subr.mxu0 0.0
    %120 = vmatpush1.msra.mxu0 0.0
    %121 = vmatprep.subr.mxu0 0.0
    %122 = vmatpush1.msra.mxu0 0.0
    %123 = vmatprep.subr.mxu0 0.0
    %124 = vmatpush1.msra.mxu0 0.0
    %125 = vmatprep.subr.mxu0 0.0
    %126 = vmatpush1.msra.mxu0 0.0
    %127 = vmatprep.subr.mxu0 0.0
    %128 = vmatpush1.msra.mxu0 0.0
    %129 = vmatprep.subr.mxu0 0.0
    %130 = vmatpush1.msra.mxu0 0.0
    %131 = vmatprep.subr.mxu0 0.0
    %132 = vmatpush1.msra.mxu0 0.0
    %133 = vmatprep.subr.mxu0 0.0
    %134 = vmatpush1.msra.mxu0 0.0
    %135 = vmatprep.mubr.f32.mxu0 0.0
    %136 = vmatmul.mubr.f32.gmra.mrb[0].mxu0 %v43
    %v137 = vpop.f32.mrb[0].mxu0
    %v138 = vadd.f32 %v69, %v137
    %v139 = vpop.f32.mrb[0].mxu0
    %140 = vmatprep.mubr.f32.mxu0 0.0
    %141 = vmatmul.mubr.f32.gmra.mrb[0].mxu0 %v44
    %v142 = vpop.f32.mrb[0].mxu0
    %v143 = vadd.f32 %v69, %v142
    %v144 = vpop.f32.mrb[0].mxu0
    %145 = vmatprep.mubr.f32.mxu0 0.0
    %146 = vmatmul.mubr.f32.gmra.mrb[0].mxu0 %v45
    %v147 = vpop.f32.mrb[0].mxu0
    %v148 = vadd.f32 %v69, %v147
    %v149 = vpop.f32.mrb[0].mxu0
    %150 = vmatprep.mubr.f32.mxu0 0.0
    %151 = vmatmul.mubr.f32.gmra.mrb[0].mxu0 %v46
    %v152 = vpop.f32.mrb[0].mxu0
    %v153 = vadd.f32 %v69, %v152
    %v154 = vpop.f32.mrb[0].mxu0
    %155 = vmatprep.mubr.f32.mxu0 0.0
    %156 = vmatmul.mubr.f32.gmra.mrb[0].mxu0 %v47
    %v157 = vpop.f32.mrb[0].mxu0
    %v158 = vadd.f32 %v69, %v157
    %v159 = vpop.f32.mrb[0].mxu0
    %160 = vdwg.mxu0
    %v161 = vmul.f32 %v138, 30.0
    %v162 = vmul.f32 %v143, 30.0
    %v163 = vmul.f32 %v148, 30.0
    %v164 = vmul.f32 %v153, 30.0
    %v165 = vmul.f32 %v158, 30.0
    %v166 = vand.u32 2147483647, %v161
    %vm167 = vcmp.le.f32.partialorder %v166, 0.7853982
    %vm168 = vcmp.lt.s32.totalorder %v161, 0
    %v169 = vand.u32 %v161, 2139095040
    %v170 = vshrl.u32 %v169, 23
    %v171 = vsub.s32 %v170, 127
    %v172 = vand.u32 2147483647, %v161
    %v173 = vand.u32 %v172, 8388607
    %v174 = vor.u32 %v173, 8388608
    %v175 = vsub.s32 0, %v174
    %v176 = vadd.s32 %v171, 1
    %vm177 = vcmp.gt.s32.totalorder %v176, 0
    %v178 = vsel %vm177, %v176, 0
    %v179 = vshrl.u32 %v178, 5
    %v180 = vand.u32 %v178, 31
    %v181 = vsub.s32 32, %v180
    %v182 = vshrl.u32 683565275, %v181
    %v183 = vshll.u32 683565275, %v180
    %v184 = vshrl.u32 2475754826, %v181
    %v185 = vor.u32 %v183, %v184
    %v186 = vshll.u32 2475754826, %v180
    %v187 = vshrl.u32 2131351028, %v181
    %v188 = vor.u32 %v186, %v187
    %v189 = vshll.u32 2131351028, %v180
    %v190 = vshrl.u32 2102212464, %v181
    %v191 = vor.u32 %v189, %v190
    %v192 = vshll.u32 2102212464, %v180
    %v193 = vshrl.u32 920167782, %v181
    %v194 = vor.u32 %v192, %v193
    %v195 = vshll.u32 920167782, %v180
    %v196 = vshrl.u32 1326507024, %v181
    %v197 = vor.u32 %v195, %v196
    %vm198 = vcmp.lt.s32.totalorder %v179, 1
    %vm199 = vcmp.lt.s32.totalorder %v179, 2
    %vm200 = vcmp.lt.s32.totalorder %v179, 3
    %vm201 = vcmp.lt.s32.totalorder %v179, 4
    %v202 = vsel %vm198, %v182, %v185
    %v203 = vsel %vm201, %v191, 2102212464
    %v204 = vsel %vm200, %v188, %v203
    %v205 = vsel %vm199, %v202, %v204
    %v206 = vsel %vm198, %v185, %v188
    %v207 = vsel %vm201, %v194, 920167782
    %v208 = vsel %vm200, %v191, %v207
    %v209 = vsel %vm199, %v206, %v208
    %v210 = vsel %vm198, %v188, %v191
    %v211 = vsel %vm201, %v197, 1326507024
    %v212 = vsel %vm200, %v194, %v211
    %v213 = vsel %vm199, %v210, %v212
    %v214 = vshll.u32 %v174, 8
    %v215 = vmul.u32.u64.compose %v214, %v213
    %v216 = vextract.low.u32 %v215
    %v217 = vextract.high.u32 %v215
    %v218 = vmul.u32.u64.compose %v214, %v209
    %v219 = vextract.low.u32 %v218
    %v220 = vextract.high.u32 %v218
    %v221 = vmul.u32 %v214, %v205
    %v222 = vadd.s32 %v217, %v219
    %vm223 = vc.u32 %v217, %v219
    %v224 = vadd.s32 %v220, 1
    %v225 = vsel %vm223, %v224, %v220
    %v226 = vadd.s32 %v221, %v225
    %v227 = vadd.s32 %v226, 536870912
    %v228 = vshrl.u32 %v227, 30
    %v229 = vshll.u32 %v228, 30
    %v230 = vsub.s32 %v226, %v229
    %vm231 = vcmp.lt.s32.totalorder %v230, 0
    %v232 = vsub.s32 0, %v230
    %v233 = vsel %vm231, %v232, %v230
    %v234 = vclz %v233
    %v235 = vsub.s32 %v234, 2
    %vm236 = vcmp.gt.s32.totalorder 0, %v235
    %v237 = vsel %vm236, 0, %v235
    %v238 = vsub.s32 32, %v237
    %v239 = vshll.u32 %v230, %v237
    %v240 = vshrl.u32 %v222, %v238
    %v241 = vor.u32 %v239, %v240
    %v242 = vsub.s32 4294967266, %v237
    %v243 = vadd.s32 %v242, 127
    %v244 = vshll.u32 %v243, 23
    %v245 = vor.u32 4788187, %v244
    %v246 = vand.u32 2147483647, %v245
    %v248 = vcvt.s32.f32 %v241
    %v249 = vmul.f32 %v248, %v246
    %v250 = vxor.u32 %v249, 2147483648
    %v251 = vsel %vm168, %v250, %v249
    %v252 = vsub.s32 4, %v228
    %v253 = vsel %vm168, %v252, %v228
    %v254 = vsel %vm167, %v161, %v251
    %v255 = vsel %vm167, 0, %v253
    %v256 = vcosq.f32.pop %v254
    %v257 = vsinq.f32.pop %v254
    %vm258 = vweird.f32 %v161
    %v259 = vadd.s32 %v255, 3
    %v260 = vand.u32 %v259, 3
    %vm261 = vcmp.lt.s32.totalorder %v260, 2
    %vm262 = vcmp.eq.s32.totalorder %v260, 0
    %v263 = vxor.u32 %v257, 2147483648
    %v264 = vsel %vm262, %v256, %v263
    %vm265 = vcmp.eq.s32.totalorder %v260, 2
    %v266 = vxor.u32 %v256, 2147483648
    %v267 = vsel %vm265, %v266, %v257
    %v268 = vsel %vm261, %v264, %v267
    %v269 = vsel %vm258, nan, %v268
    %v270 = vand.u32 2147483647, %v162
    %vm271 = vcmp.le.f32.partialorder %v270, 0.7853982
    %vm272 = vcmp.lt.s32.totalorder %v162, 0
    %v273 = vand.u32 %v162, 2139095040
    %v274 = vshrl.u32 %v273, 23
    %v275 = vsub.s32 %v274, 127
    %v276 = vand.u32 2147483647, %v162
    %v277 = vand.u32 %v276, 8388607
    %v278 = vor.u32 %v277, 8388608
    %v279 = vsub.s32 0, %v278
    %v280 = vadd.s32 %v275, 1
    %vm281 = vcmp.gt.s32.totalorder %v280, 0
    %v282 = vsel %vm281, %v280, 0
    %v283 = vshrl.u32 %v282, 5
    %v284 = vand.u32 %v282, 31
    %v285 = vsub.s32 32, %v284
    %v286 = vshrl.u32 683565275, %v285
    %v287 = vshll.u32 683565275, %v284
    %v288 = vshrl.u32 2475754826, %v285
    %v289 = vor.u32 %v287, %v288
    %v290 = vshll.u32 2475754826, %v284
    %v291 = vshrl.u32 2131351028, %v285
    %v292 = vor.u32 %v290, %v291
    %v293 = vshll.u32 2131351028, %v284
    %v294 = vshrl.u32 2102212464, %v285
    %v295 = vor.u32 %v293, %v294
    %v296 = vshll.u32 2102212464, %v284
    %v297 = vshrl.u32 920167782, %v285
    %v298 = vor.u32 %v296, %v297
    %v299 = vshll.u32 920167782, %v284
    %v300 = vshrl.u32 1326507024, %v285
    %v301 = vor.u32 %v299, %v300
    %vm302 = vcmp.lt.s32.totalorder %v283, 1
    %vm303 = vcmp.lt.s32.totalorder %v283, 2
    %vm304 = vcmp.lt.s32.totalorder %v283, 3
    %vm305 = vcmp.lt.s32.totalorder %v283, 4
    %v306 = vsel %vm302, %v286, %v289
    %v307 = vsel %vm305, %v295, 2102212464
    %v308 = vsel %vm304, %v292, %v307
    %v309 = vsel %vm303, %v306, %v308
    %v310 = vsel %vm302, %v289, %v292
    %v311 = vsel %vm305, %v298, 920167782
    %v312 = vsel %vm304, %v295, %v311
    %v313 = vsel %vm303, %v310, %v312
    %v314 = vsel %vm302, %v292, %v295
    %v315 = vsel %vm305, %v301, 1326507024
    %v316 = vsel %vm304, %v298, %v315
    %v317 = vsel %vm303, %v314, %v316
    %v318 = vshll.u32 %v278, 8
    %v319 = vmul.u32.u64.compose %v318, %v317
    %v320 = vextract.low.u32 %v319
    %v321 = vextract.high.u32 %v319
    %v322 = vmul.u32.u64.compose %v318, %v313
    %v323 = vextract.low.u32 %v322
    %v324 = vextract.high.u32 %v322
    %v325 = vmul.u32 %v318, %v309
    %v326 = vadd.s32 %v321, %v323
    %vm327 = vc.u32 %v321, %v323
    %v328 = vadd.s32 %v324, 1
    %v329 = vsel %vm327, %v328, %v324
    %v330 = vadd.s32 %v325, %v329
    %v331 = vadd.s32 %v330, 536870912
    %v332 = vshrl.u32 %v331, 30
    %v333 = vshll.u32 %v332, 30
    %v334 = vsub.s32 %v330, %v333
    %vm335 = vcmp.lt.s32.totalorder %v334, 0
    %v336 = vsub.s32 0, %v334
    %v337 = vsel %vm335, %v336, %v334
    %v338 = vclz %v337
    %v339 = vsub.s32 %v338, 2
    %vm340 = vcmp.gt.s32.totalorder 0, %v339
    %v341 = vsel %vm340, 0, %v339
    %v342 = vsub.s32 32, %v341
    %v343 = vshll.u32 %v334, %v341
    %v344 = vshrl.u32 %v326, %v342
    %v345 = vor.u32 %v343, %v344
    %v346 = vsub.s32 4294967266, %v341
    %v347 = vadd.s32 %v346, 127
    %v348 = vshll.u32 %v347, 23
    %v349 = vor.u32 4788187, %v348
    %v350 = vand.u32 2147483647, %v349
    %v352 = vcvt.s32.f32 %v345
    %v353 = vmul.f32 %v352, %v350
    %v354 = vxor.u32 %v353, 2147483648
    %v355 = vsel %vm272, %v354, %v353
    %v356 = vsub.s32 4, %v332
    %v357 = vsel %vm272, %v356, %v332
    %v358 = vsel %vm271, %v162, %v355
    %v359 = vsel %vm271, 0, %v357
    %v360 = vcosq.f32.pop %v358
    %v361 = vsinq.f32.pop %v358
    %vm362 = vweird.f32 %v162
    %v363 = vadd.s32 %v359, 3
    %v364 = vand.u32 %v363, 3
    %vm365 = vcmp.lt.s32.totalorder %v364, 2
    %vm366 = vcmp.eq.s32.totalorder %v364, 0
    %v367 = vxor.u32 %v361, 2147483648
    %v368 = vsel %vm366, %v360, %v367
    %vm369 = vcmp.eq.s32.totalorder %v364, 2
    %v370 = vxor.u32 %v360, 2147483648
    %v371 = vsel %vm369, %v370, %v361
    %v372 = vsel %vm365, %v368, %v371
    %v373 = vsel %vm362, nan, %v372
    %v374 = vand.u32 2147483647, %v163
    %vm375 = vcmp.le.f32.partialorder %v374, 0.7853982
    %vm376 = vcmp.lt.s32.totalorder %v163, 0
    %v377 = vand.u32 %v163, 2139095040
    %v378 = vshrl.u32 %v377, 23
    %v379 = vsub.s32 %v378, 127
    %v380 = vand.u32 2147483647, %v163
    %v381 = vand.u32 %v380, 8388607
    %v382 = vor.u32 %v381, 8388608
    %v383 = vsub.s32 0, %v382
    %v384 = vadd.s32 %v379, 1
    %vm385 = vcmp.gt.s32.totalorder %v384, 0
    %v386 = vsel %vm385, %v384, 0
    %v387 = vshrl.u32 %v386, 5
    %v388 = vand.u32 %v386, 31
    %v389 = vsub.s32 32, %v388
    %v390 = vshrl.u32 683565275, %v389
    %v391 = vshll.u32 683565275, %v388
    %v392 = vshrl.u32 2475754826, %v389
    %v393 = vor.u32 %v391, %v392
    %v394 = vshll.u32 2475754826, %v388
    %v395 = vshrl.u32 2131351028, %v389
    %v396 = vor.u32 %v394, %v395
    %v397 = vshll.u32 2131351028, %v388
    %v398 = vshrl.u32 2102212464, %v389
    %v399 = vor.u32 %v397, %v398
    %v400 = vshll.u32 2102212464, %v388
    %v401 = vshrl.u32 920167782, %v389
    %v402 = vor.u32 %v400, %v401
    %v403 = vshll.u32 920167782, %v388
    %v404 = vshrl.u32 1326507024, %v389
    %v405 = vor.u32 %v403, %v404
    %vm406 = vcmp.lt.s32.totalorder %v387, 1
    %vm407 = vcmp.lt.s32.totalorder %v387, 2
    %vm408 = vcmp.lt.s32.totalorder %v387, 3
    %vm409 = vcmp.lt.s32.totalorder %v387, 4
    %v410 = vsel %vm406, %v390, %v393
    %v411 = vsel %vm409, %v399, 2102212464
    %v412 = vsel %vm408, %v396, %v411
    %v413 = vsel %vm407, %v410, %v412
    %v414 = vsel %vm406, %v393, %v396
    %v415 = vsel %vm409, %v402, 920167782
    %v416 = vsel %vm408, %v399, %v415
    %v417 = vsel %vm407, %v414, %v416
    %v418 = vsel %vm406, %v396, %v399
    %v419 = vsel %vm409, %v405, 1326507024
    %v420 = vsel %vm408, %v402, %v419
    %v421 = vsel %vm407, %v418, %v420
    %v422 = vshll.u32 %v382, 8
    %v423 = vmul.u32.u64.compose %v422, %v421
    %v424 = vextract.low.u32 %v423
    %v425 = vextract.high.u32 %v423
    %v426 = vmul.u32.u64.compose %v422, %v417
    %v427 = vextract.low.u32 %v426
    %v428 = vextract.high.u32 %v426
    %v429 = vmul.u32 %v422, %v413
    %v430 = vadd.s32 %v425, %v427
    %vm431 = vc.u32 %v425, %v427
    %v432 = vadd.s32 %v428, 1
    %v433 = vsel %vm431, %v432, %v428
    %v434 = vadd.s32 %v429, %v433
    %v435 = vadd.s32 %v434, 536870912
    %v436 = vshrl.u32 %v435, 30
    %v437 = vshll.u32 %v436, 30
    %v438 = vsub.s32 %v434, %v437
    %vm439 = vcmp.lt.s32.totalorder %v438, 0
    %v440 = vsub.s32 0, %v438
    %v441 = vsel %vm439, %v440, %v438
    %v442 = vclz %v441
    %v443 = vsub.s32 %v442, 2
    %vm444 = vcmp.gt.s32.totalorder 0, %v443
    %v445 = vsel %vm444, 0, %v443
    %v446 = vsub.s32 32, %v445
    %v447 = vshll.u32 %v438, %v445
    %v448 = vshrl.u32 %v430, %v446
    %v449 = vor.u32 %v447, %v448
    %v450 = vsub.s32 4294967266, %v445
    %v451 = vadd.s32 %v450, 127
    %v452 = vshll.u32 %v451, 23
    %v453 = vor.u32 4788187, %v452
    %v454 = vand.u32 2147483647, %v453
    %v456 = vcvt.s32.f32 %v449
    %v457 = vmul.f32 %v456, %v454
    %v458 = vxor.u32 %v457, 2147483648
    %v459 = vsel %vm376, %v458, %v457
    %v460 = vsub.s32 4, %v436
    %v461 = vsel %vm376, %v460, %v436
    %v462 = vsel %vm375, %v163, %v459
    %v463 = vsel %vm375, 0, %v461
    %v464 = vcosq.f32.pop %v462
    %v465 = vsinq.f32.pop %v462
    %vm466 = vweird.f32 %v163
    %v467 = vadd.s32 %v463, 3
    %v468 = vand.u32 %v467, 3
    %vm469 = vcmp.lt.s32.totalorder %v468, 2
    %vm470 = vcmp.eq.s32.totalorder %v468, 0
    %v471 = vxor.u32 %v465, 2147483648
    %v472 = vsel %vm470, %v464, %v471
    %vm473 = vcmp.eq.s32.totalorder %v468, 2
    %v474 = vxor.u32 %v464, 2147483648
    %v475 = vsel %vm473, %v474, %v465
    %v476 = vsel %vm469, %v472, %v475
    %v477 = vsel %vm466, nan, %v476
    %v478 = vand.u32 2147483647, %v164
    %vm479 = vcmp.le.f32.partialorder %v478, 0.7853982
    %vm480 = vcmp.lt.s32.totalorder %v164, 0
    %v481 = vand.u32 %v164, 2139095040
    %v482 = vshrl.u32 %v481, 23
    %v483 = vsub.s32 %v482, 127
    %v484 = vand.u32 2147483647, %v164
    %v485 = vand.u32 %v484, 8388607
    %v486 = vor.u32 %v485, 8388608
    %v487 = vsub.s32 0, %v486
    %v488 = vadd.s32 %v483, 1
    %vm489 = vcmp.gt.s32.totalorder %v488, 0
    %v490 = vsel %vm489, %v488, 0
    %v491 = vshrl.u32 %v490, 5
    %v492 = vand.u32 %v490, 31
    %v493 = vsub.s32 32, %v492
    %v494 = vshrl.u32 683565275, %v493
    %v495 = vshll.u32 683565275, %v492
    %v496 = vshrl.u32 2475754826, %v493
    %v497 = vor.u32 %v495, %v496
    %v498 = vshll.u32 2475754826, %v492
    %v499 = vshrl.u32 2131351028, %v493
    %v500 = vor.u32 %v498, %v499
    %v501 = vshll.u32 2131351028, %v492
    %v502 = vshrl.u32 2102212464, %v493
    %v503 = vor.u32 %v501, %v502
    %v504 = vshll.u32 2102212464, %v492
    %v505 = vshrl.u32 920167782, %v493
    %v506 = vor.u32 %v504, %v505
    %v507 = vshll.u32 920167782, %v492
    %v508 = vshrl.u32 1326507024, %v493
    %v509 = vor.u32 %v507, %v508
    %vm510 = vcmp.lt.s32.totalorder %v491, 1
    %vm511 = vcmp.lt.s32.totalorder %v491, 2
    %vm512 = vcmp.lt.s32.totalorder %v491, 3
    %vm513 = vcmp.lt.s32.totalorder %v491, 4
    %v514 = vsel %vm510, %v494, %v497
    %v515 = vsel %vm513, %v503, 2102212464
    %v516 = vsel %vm512, %v500, %v515
    %v517 = vsel %vm511, %v514, %v516
    %v518 = vsel %vm510, %v497, %v500
    %v519 = vsel %vm513, %v506, 920167782
    %v520 = vsel %vm512, %v503, %v519
    %v521 = vsel %vm511, %v518, %v520
    %v522 = vsel %vm510, %v500, %v503
    %v523 = vsel %vm513, %v509, 1326507024
    %v524 = vsel %vm512, %v506, %v523
    %v525 = vsel %vm511, %v522, %v524
    %v526 = vshll.u32 %v486, 8
    %v527 = vmul.u32.u64.compose %v526, %v525
    %v528 = vextract.low.u32 %v527
    %v529 = vextract.high.u32 %v527
    %v530 = vmul.u32.u64.compose %v526, %v521
    %v531 = vextract.low.u32 %v530
    %v532 = vextract.high.u32 %v530
    %v533 = vmul.u32 %v526, %v517
    %v534 = vadd.s32 %v529, %v531
    %vm535 = vc.u32 %v529, %v531
    %v536 = vadd.s32 %v532, 1
    %v537 = vsel %vm535, %v536, %v532
    %v538 = vadd.s32 %v533, %v537
    %v539 = vadd.s32 %v538, 536870912
    %v540 = vshrl.u32 %v539, 30
    %v541 = vshll.u32 %v540, 30
    %v542 = vsub.s32 %v538, %v541
    %vm543 = vcmp.lt.s32.totalorder %v542, 0
    %v544 = vsub.s32 0, %v542
    %v545 = vsel %vm543, %v544, %v542
    %v546 = vclz %v545
    %v547 = vsub.s32 %v546, 2
    %vm548 = vcmp.gt.s32.totalorder 0, %v547
    %v549 = vsel %vm548, 0, %v547
    %v550 = vsub.s32 32, %v549
    %v551 = vshll.u32 %v542, %v549
    %v552 = vshrl.u32 %v534, %v550
    %v553 = vor.u32 %v551, %v552
    %v554 = vsub.s32 4294967266, %v549
    %v555 = vadd.s32 %v554, 127
    %v556 = vshll.u32 %v555, 23
    %v557 = vor.u32 4788187, %v556
    %v558 = vand.u32 2147483647, %v557
    %v560 = vcvt.s32.f32 %v553
    %v561 = vmul.f32 %v560, %v558
    %v562 = vxor.u32 %v561, 2147483648
    %v563 = vsel %vm480, %v562, %v561
    %v564 = vsub.s32 4, %v540
    %v565 = vsel %vm480, %v564, %v540
    %v566 = vsel %vm479, %v164, %v563
    %v567 = vsel %vm479, 0, %v565
    %v568 = vcosq.f32.pop %v566
    %v569 = vsinq.f32.pop %v566
    %vm570 = vweird.f32 %v164
    %v571 = vadd.s32 %v567, 3
    %v572 = vand.u32 %v571, 3
    %vm573 = vcmp.lt.s32.totalorder %v572, 2
    %vm574 = vcmp.eq.s32.totalorder %v572, 0
    %v575 = vxor.u32 %v569, 2147483648
    %v576 = vsel %vm574, %v568, %v575
    %vm577 = vcmp.eq.s32.totalorder %v572, 2
    %v578 = vxor.u32 %v568, 2147483648
    %v579 = vsel %vm577, %v578, %v569
    %v580 = vsel %vm573, %v576, %v579
    %v581 = vsel %vm570, nan, %v580
    %v582 = vand.u32 2147483647, %v165
    %vm583 = vcmp.le.f32.partialorder %v582, 0.7853982
    %vm584 = vcmp.lt.s32.totalorder %v165, 0
    %v585 = vand.u32 %v165, 2139095040
    %v586 = vshrl.u32 %v585, 23
    %v587 = vsub.s32 %v586, 127
    %v588 = vand.u32 2147483647, %v165
    %v589 = vand.u32 %v588, 8388607
    %v590 = vor.u32 %v589, 8388608
    %v591 = vsub.s32 0, %v590
    %v592 = vadd.s32 %v587, 1
    %vm593 = vcmp.gt.s32.totalorder %v592, 0
    %v594 = vsel %vm593, %v592, 0
    %v595 = vshrl.u32 %v594, 5
    %v596 = vand.u32 %v594, 31
    %v597 = vsub.s32 32, %v596
    %v598 = vshrl.u32 683565275, %v597
    %v599 = vshll.u32 683565275, %v596
    %v600 = vshrl.u32 2475754826, %v597
    %v601 = vor.u32 %v599, %v600
    %v602 = vshll.u32 2475754826, %v596
    %v603 = vshrl.u32 2131351028, %v597
    %v604 = vor.u32 %v602, %v603
    %v605 = vshll.u32 2131351028, %v596
    %v606 = vshrl.u32 2102212464, %v597
    %v607 = vor.u32 %v605, %v606
    %v608 = vshll.u32 2102212464, %v596
    %v609 = vshrl.u32 920167782, %v597
    %v610 = vor.u32 %v608, %v609
    %v611 = vshll.u32 920167782, %v596
    %v612 = vshrl.u32 1326507024, %v597
    %v613 = vor.u32 %v611, %v612
    %vm614 = vcmp.lt.s32.totalorder %v595, 1
    %vm615 = vcmp.lt.s32.totalorder %v595, 2
    %vm616 = vcmp.lt.s32.totalorder %v595, 3
    %vm617 = vcmp.lt.s32.totalorder %v595, 4
    %v618 = vsel %vm614, %v598, %v601
    %v619 = vsel %vm617, %v607, 2102212464
    %v620 = vsel %vm616, %v604, %v619
    %v621 = vsel %vm615, %v618, %v620
    %v622 = vsel %vm614, %v601, %v604
    %v623 = vsel %vm617, %v610, 920167782
    %v624 = vsel %vm616, %v607, %v623
    %v625 = vsel %vm615, %v622, %v624
    %v626 = vsel %vm614, %v604, %v607
    %v627 = vsel %vm617, %v613, 1326507024
    %v628 = vsel %vm616, %v610, %v627
    %v629 = vsel %vm615, %v626, %v628
    %v630 = vshll.u32 %v590, 8
    %v631 = vmul.u32.u64.compose %v630, %v629
    %v632 = vextract.low.u32 %v631
    %v633 = vextract.high.u32 %v631
    %v634 = vmul.u32.u64.compose %v630, %v625
    %v635 = vextract.low.u32 %v634
    %v636 = vextract.high.u32 %v634
    %v637 = vmul.u32 %v630, %v621
    %v638 = vadd.s32 %v633, %v635
    %vm639 = vc.u32 %v633, %v635
    %v640 = vadd.s32 %v636, 1
    %v641 = vsel %vm639, %v640, %v636
    %v642 = vadd.s32 %v637, %v641
    %v643 = vadd.s32 %v642, 536870912
    %v644 = vshrl.u32 %v643, 30
    %v645 = vshll.u32 %v644, 30
    %v646 = vsub.s32 %v642, %v645
    %vm647 = vcmp.lt.s32.totalorder %v646, 0
    %v648 = vsub.s32 0, %v646
    %v649 = vsel %vm647, %v648, %v646
    %v650 = vclz %v649
    %v651 = vsub.s32 %v650, 2
    %vm652 = vcmp.gt.s32.totalorder 0, %v651
    %v653 = vsel %vm652, 0, %v651
    %v654 = vsub.s32 32, %v653
    %v655 = vshll.u32 %v646, %v653
    %v656 = vshrl.u32 %v638, %v654
    %v657 = vor.u32 %v655, %v656
    %v658 = vsub.s32 4294967266, %v653
    %v659 = vadd.s32 %v658, 127
    %v660 = vshll.u32 %v659, 23
    %v661 = vor.u32 4788187, %v660
    %v662 = vand.u32 2147483647, %v661
    %v664 = vcvt.s32.f32 %v657
    %v665 = vmul.f32 %v664, %v662
    %v666 = vxor.u32 %v665, 2147483648
    %v667 = vsel %vm584, %v666, %v665
    %v668 = vsub.s32 4, %v644
    %v669 = vsel %vm584, %v668, %v644
    %v670 = vsel %vm583, %v165, %v667
    %v671 = vsel %vm583, 0, %v669
    %v672 = vcosq.f32.pop %v670
    %v673 = vsinq.f32.pop %v670
    %vm674 = vweird.f32 %v165
    %v675 = vadd.s32 %v671, 3
    %v676 = vand.u32 %v675, 3
    %vm677 = vcmp.lt.s32.totalorder %v676, 2
    %vm678 = vcmp.eq.s32.totalorder %v676, 0
    %v679 = vxor.u32 %v673, 2147483648
    %v680 = vsel %vm678, %v672, %v679
    %vm681 = vcmp.eq.s32.totalorder %v676, 2
    %v682 = vxor.u32 %v672, 2147483648
    %v683 = vsel %vm681, %v682, %v673
    %v684 = vsel %vm677, %v680, %v683
    %v685 = vsel %vm674, nan, %v684
    %686 = vst [vmem:[#allocation7] sm:$0xff] %v269
    %687 = vst [vmem:[#allocation7 + $0x8] sm:$0xff] %v373
    %688 = vst [vmem:[#allocation7 + $0x10] sm:$0xff] %v477
    %689 = vst [vmem:[#allocation7 + $0x18] sm:$0xff] %v581
    %690 = vst [vmem:[#allocation7 + $0x20] sm:$0xff] %v685
    // Predicated region
    $region22: #{tpu_custom_call.1} parent=1 // pred_check
      _
    $region23: #{tpu_custom_call.1} parent=1 // pred_check_branch
      %692 = sbr.rel (0) target = $region25
    $region24: #{tpu_custom_call.1} parent=1 // pred_region
      %s694 = ssub.s32 640, 640
      %695 = vsyncadd [#allocation4], %s694
      %s696 = sshll.u32 [#allocation7], 4
      %s697 = int_to_ptr.vmem [resolvable:$true] %s696
      %702 = dma.vmem_to_hbm [thread:$0]  %s697, 640, %s3, [#allocation4], 128, 128, 8
    $region25: #{tpu_custom_call.1} parent=1 // pred_fallthru
      _
    // Predicated region
    $region26: #{tpu_custom_call.1} parent=1 // pred_check
      _
    $region27: #{tpu_custom_call.1} parent=1 // pred_check_branch
      %704 = sbr.rel (0) target = $region29
    $region28: #{tpu_custom_call.1} parent=1 // pred_region
      %705 = dma.done [#allocation4], 640
    $region29: #{tpu_custom_call.1} parent=1 // pred_fallthru
      _
    %706 = vsyncpa [#allocation3], 1
    %707 = vsyncpa [#allocation6], 1
    %708 = vsyncpa [#allocation4], 1

// kernel: tpu_custom_call.1
$region0: #{tpu_custom_call.1}
  #allocation0 [shape = 'u32[]', space=smem, size = 0x4, offset = 0x4, fixed_abs, tag = 'smem constant byte address 0x4 - core index']
  #allocation1 [shape = 'u32[144,128]{1,0:T(1,128)}', space=vmem, size = 0x12000, scoped, tag = 'internal scratch']
  %s0 = inlined_call_operand.hbm [shape: f32[40,128], index: 0, kind: input, shape index: {}]
  %s1 = inlined_call_operand.hbm [shape: f32[128,128], index: 1, kind: input, shape index: {}]
  %s2 = inlined_call_operand.vmem [shape: f32[1,128], index: 2, kind: input, shape index: {}]
  %s3 = inlined_call_operand.hbm [shape: f32[40,128], index: 3, kind: output, shape index: {}]
  %s4 = sld [smem:[#allocation0]]
  $region30: #{tpu_custom_call.1} parent=0
    _
  %s6 = ssub.s32 1, %s4
  %s7 = scalar_select 0, %s6, %s4
  $region1: #{tpu_custom_call.1} parent=0
    #allocation2 [shape = 'u8[20480]{0}', space=vmem, size = 0x5000, scoped, tag = 'input window, operand 0, single buffered']
    #allocation3 [shape = 's32[1]{0}', space=sflag, size = 0x4, scoped, tag = 'scoped memory for tpu_custom_call.1']
    #allocation4 [shape = 's32[1]{0}', space=sflag, size = 0x4, scoped, tag = 'scoped memory for tpu_custom_call.1']
    #allocation5 [shape = 'u8[65536]{0}', space=vmem, size = 0x10000, scoped, tag = 'input window, operand 1, single buffered']
    #allocation6 [shape = 's32[1]{0}', space=sflag, size = 0x4, scoped, tag = 'scoped memory for tpu_custom_call.1']
    #allocation7 [shape = 'u8[20480]{0}', space=vmem, size = 0x5000, scoped, tag = 'output window, operand 0, single buffered']
    %8 = vsyncpa [#allocation3], 0
    %9 = vsyncpa [#allocation6], 0
    %10 = vsyncpa [#allocation4], 0
    // Predicated region
    $region2: #{tpu_custom_call.1} parent=1 // pred_check
      _
    $region3: #{tpu_custom_call.1} parent=1 // pred_check_branch
      %12 = sbr.rel (0) target = $region5
    $region4: #{tpu_custom_call.1} parent=1 // pred_region
      %s14 = ssub.s32 640, 640
      %15 = vsyncadd [#allocation3], %s14
      %s16 = sshll.u32 [#allocation2], 4
      %s17 = int_to_ptr.vmem [resolvable:$true] %s16
      %22 = dma.hbm_to_vmem [thread:$0]  %s0, 640, %s17, [#allocation3], 128, 128, 8
    $region5: #{tpu_custom_call.1} parent=1 // pred_fallthru
      _
    // Predicated region
    $region6: #{tpu_custom_call.1} parent=1 // pred_check
      _
    $region7: #{tpu_custom_call.1} parent=1 // pred_check_branch
      %24 = sbr.rel (0) target = $region9
    $region8: #{tpu_custom_call.1} parent=1 // pred_region
      %s26 = ssub.s32 2048, 2048
      %27 = vsyncadd [#allocation6], %s26
      %s28 = sshll.u32 [#allocation5], 4
      %s29 = int_to_ptr.vmem [resolvable:$true] %s28
      %34 = dma.hbm_to_vmem [thread:$0]  %s1, 2048, %s29, [#allocation6], 128, 128, 8
    $region9: #{tpu_custom_call.1} parent=1 // pred_fallthru
      _
    // Predicated region
    $region10: #{tpu_custom_call.1} parent=1 // pred_check
      _
    $region11: #{tpu_custom_call.1} parent=1 // pred_check_branch
      %36 = sbr.rel (0) target = $region13
    $region12: #{tpu_custom_call.1} parent=1 // pred_region
      _
    $region13: #{tpu_custom_call.1} parent=1 // pred_fallthru
      _
    // Predicated region
    $region14: #{tpu_custom_call.1} parent=1 // pred_check
      _
    $region15: #{tpu_custom_call.1} parent=1 // pred_check_branch
      %38 = sbr.rel (0) target = $region17
    $region16: #{tpu_custom_call.1} parent=1 // pred_region
      %39 = dma.done [#allocation3], 640
    $region17: #{tpu_custom_call.1} parent=1 // pred_fallthru
      _
    // Predicated region
    $region18: #{tpu_custom_call.1} parent=1 // pred_check
      _
    $region19: #{tpu_custom_call.1} parent=1 // pred_check_branch
      %41 = sbr.rel (0) target = $region21
    $region20: #{tpu_custom_call.1} parent=1 // pred_region
      %42 = dma.done [#allocation6], 2048
    $region21: #{tpu_custom_call.1} parent=1 // pred_fallthru
      _
    %v43 = vld [vmem:[#allocation2] sm:$0xff]
    %v44 = vld [vmem:[#allocation2 + $0x8] sm:$0xff]
    %v45 = vld [vmem:[#allocation2 + $0x10] sm:$0xff]
    %v46 = vld [vmem:[#allocation2 + $0x18] sm:$0xff]
    %v47 = vld [vmem:[#allocation2 + $0x20] sm:$0xff]
    %v48 = vld [vmem:[#allocation5] sm:$0xff]
    %v49 = vld [vmem:[#allocation5 + $0x8] sm:$0xff]
    %v50 = vld [vmem:[#allocation5 + $0x10] sm:$0xff]
    %v51 = vld [vmem:[#allocation5 + $0x18] sm:$0xff]
    %v52 = vld [vmem:[#allocation5 + $0x20] sm:$0xff]
    %v53 = vld [vmem:[#allocation5 + $0x28] sm:$0xff]
    %v54 = vld [vmem:[#allocation5 + $0x30] sm:$0xff]
    %v55 = vld [vmem:[#allocation5 + $0x38] sm:$0xff]
    %v56 = vld [vmem:[#allocation5 + $0x40] sm:$0xff]
    %v57 = vld [vmem:[#allocation5 + $0x48] sm:$0xff]
    %v58 = vld [vmem:[#allocation5 + $0x50] sm:$0xff]
    %v59 = vld [vmem:[#allocation5 + $0x58] sm:$0xff]
    %v60 = vld [vmem:[#allocation5 + $0x60] sm:$0xff]
    %v61 = vld [vmem:[#allocation5 + $0x68] sm:$0xff]
    %v62 = vld [vmem:[#allocation5 + $0x70] sm:$0xff]
    %v63 = vld [vmem:[#allocation5 + $0x78] sm:$0xff]
    %v64 = vld [vmem:[%s2] sm:$0x1]
    %v66 = vlaneseq
    %v67 = vshrl.u32 %v66, 7
    %v68 = vsub.s32 0, %v67
    %v69 = vrot.slane %v64, %v68
    %71 = vmatprep.subr.mxu0 0.0
    %72 = vmatpush1.msra.mxu0 %v48
    %73 = vmatprep.subr.mxu0 0.0
    %74 = vmatpush1.msra.mxu0 %v49
    %75 = vmatprep.subr.mxu0 0.0
    %76 = vmatpush1.msra.mxu0 %v50
    %77 = vmatprep.subr.mxu0 0.0
    %78 = vmatpush1.msra.mxu0 %v51
    %79 = vmatprep.subr.mxu0 0.0
    %80 = vmatpush1.msra.mxu0 %v52
    %81 = vmatprep.subr.mxu0 0.0
    %82 = vmatpush1.msra.mxu0 %v53
    %83 = vmatprep.subr.mxu0 0.0
    %84 = vmatpush1.msra.mxu0 %v54
    %85 = vmatprep.subr.mxu0 0.0
    %86 = vmatpush1.msra.mxu0 %v55
    %87 = vmatprep.subr.mxu0 0.0
    %88 = vmatpush1.msra.mxu0 %v56
    %89 = vmatprep.subr.mxu0 0.0
    %90 = vmatpush1.msra.mxu0 %v57
    %91 = vmatprep.subr.mxu0 0.0
    %92 = vmatpush1.msra.mxu0 %v58
    %93 = vmatprep.subr.mxu0 0.0
    %94 = vmatpush1.msra.mxu0 %v59
    %95 = vmatprep.subr.mxu0 0.0
    %96 = vmatpush1.msra.mxu0 %v60
    %97 = vmatprep.subr.mxu0 0.0
    %98 = vmatpush1.msra.mxu0 %v61
    %99 = vmatprep.subr.mxu0 0.0
    %100 = vmatpush1.msra.mxu0 %v62
    %101 = vmatprep.subr.mxu0 0.0
    %102 = vmatpush1.msra.mxu0 %v63
    %103 = vmatprep.subr.mxu0 0.0
    %104 = vmatpush1.msra.mxu0 0.0
    %105 = vmatprep.subr.mxu0 0.0
    %106 = vmatpush1.msra.mxu0 0.0
    %107 = vmatprep.subr.mxu0 0.0
    %108 = vmatpush1.msra.mxu0 0.0
    %109 = vmatprep.subr.mxu0 0.0
    %110 = vmatpush1.msra.mxu0 0.0
    %111 = vmatprep.subr.mxu0 0.0
    %112 = vmatpush1.msra.mxu0 0.0
    %113 = vmatprep.subr.mxu0 0.0
    %114 = vmatpush1.msra.mxu0 0.0
    %115 = vmatprep.subr.mxu0 0.0
    %116 = vmatpush1.msra.mxu0 0.0
    %117 = vmatprep.subr.mxu0 0.0
    %118 = vmatpush1.msra.mxu0 0.0
    %119 = vmatprep.subr.mxu0 0.0
    %120 = vmatpush1.msra.mxu0 0.0
    %121 = vmatprep.subr.mxu0 0.0
    %122 = vmatpush1.msra.mxu0 0.0
    %123 = vmatprep.subr.mxu0 0.0
    %124 = vmatpush1.msra.mxu0 0.0
    %125 = vmatprep.subr.mxu0 0.0
    %126 = vmatpush1.msra.mxu0 0.0
    %127 = vmatprep.subr.mxu0 0.0
    %128 = vmatpush1.msra.mxu0 0.0
    %129 = vmatprep.subr.mxu0 0.0
    %130 = vmatpush1.msra.mxu0 0.0
    %131 = vmatprep.subr.mxu0 0.0
    %132 = vmatpush1.msra.mxu0 0.0
    %133 = vmatprep.subr.mxu0 0.0
    %134 = vmatpush1.msra.mxu0 0.0
    %135 = vmatprep.mubr.f32.mxu0 0.0
    %136 = vmatmul.mubr.f32.gmra.mrb[0].mxu0 %v43
    %v137 = vpop.f32.mrb[0].mxu0
    %v138 = vadd.f32 %v69, %v137
    %v139 = vpop.f32.mrb[0].mxu0
    %140 = vmatprep.mubr.f32.mxu0 0.0
    %141 = vmatmul.mubr.f32.gmra.mrb[0].mxu0 %v44
    %v142 = vpop.f32.mrb[0].mxu0
    %v143 = vadd.f32 %v69, %v142
    %v144 = vpop.f32.mrb[0].mxu0
    %145 = vmatprep.mubr.f32.mxu0 0.0
    %146 = vmatmul.mubr.f32.gmra.mrb[0].mxu0 %v45
    %v147 = vpop.f32.mrb[0].mxu0
    %v148 = vadd.f32 %v69, %v147
    %v149 = vpop.f32.mrb[0].mxu0
    %150 = vmatprep.mubr.f32.mxu0 0.0
    %151 = vmatmul.mubr.f32.gmra.mrb[0].mxu0 %v46
    %v152 = vpop.f32.mrb[0].mxu0
    %v153 = vadd.f32 %v69, %v152
    %v154 = vpop.f32.mrb[0].mxu0
    %155 = vmatprep.mubr.f32.mxu0 0.0
    %156 = vmatmul.mubr.f32.gmra.mrb[0].mxu0 %v47
    %v157 = vpop.f32.mrb[0].mxu0
    %v158 = vadd.f32 %v69, %v157
    %v159 = vpop.f32.mrb[0].mxu0
    %160 = vdwg.mxu0
    %v161 = vmul.f32 %v138, 30.0
    %v162 = vmul.f32 %v143, 30.0
    %v163 = vmul.f32 %v148, 30.0
    %v164 = vmul.f32 %v153, 30.0
    %v165 = vmul.f32 %v158, 30.0
    %v166 = vand.u32 2147483647, %v161
    %vm167 = vcmp.le.f32.partialorder %v166, 0.7853982
    %vm168 = vcmp.lt.s32.totalorder %v161, 0
    %v169 = vand.u32 %v161, 2139095040
    %v170 = vshrl.u32 %v169, 23
    %v171 = vsub.s32 %v170, 127
    %v172 = vand.u32 2147483647, %v161
    %v173 = vand.u32 %v172, 8388607
    %v174 = vor.u32 %v173, 8388608
    %v175 = vsub.s32 0, %v174
    %v176 = vadd.s32 %v171, 1
    %vm177 = vcmp.gt.s32.totalorder %v176, 0
    %v178 = vsel %vm177, %v176, 0
    %v179 = vshrl.u32 %v178, 5
    %v180 = vand.u32 %v178, 31
    %v181 = vsub.s32 32, %v180
    %v182 = vshrl.u32 683565275, %v181
    %v183 = vshll.u32 683565275, %v180
    %v184 = vshrl.u32 2475754826, %v181
    %v185 = vor.u32 %v183, %v184
    %v186 = vshll.u32 2475754826, %v180
    %v187 = vshrl.u32 2131351028, %v181
    %v188 = vor.u32 %v186, %v187
    %v189 = vshll.u32 2131351028, %v180
    %v190 = vshrl.u32 2102212464, %v181
    %v191 = vor.u32 %v189, %v190
    %v192 = vshll.u32 2102212464, %v180
    %v193 = vshrl.u32 920167782, %v181
    %v194 = vor.u32 %v192, %v193
    %v195 = vshll.u32 920167782, %v180
    %v196 = vshrl.u32 1326507024, %v181
    %v197 = vor.u32 %v195, %v196
    %vm198 = vcmp.lt.s32.totalorder %v179, 1
    %vm199 = vcmp.lt.s32.totalorder %v179, 2
    %vm200 = vcmp.lt.s32.totalorder %v179, 3
    %vm201 = vcmp.lt.s32.totalorder %v179, 4
    %v202 = vsel %vm198, %v182, %v185
    %v203 = vsel %vm201, %v191, 2102212464
    %v204 = vsel %vm200, %v188, %v203
    %v205 = vsel %vm199, %v202, %v204
    %v206 = vsel %vm198, %v185, %v188
    %v207 = vsel %vm201, %v194, 920167782
    %v208 = vsel %vm200, %v191, %v207
    %v209 = vsel %vm199, %v206, %v208
    %v210 = vsel %vm198, %v188, %v191
    %v211 = vsel %vm201, %v197, 1326507024
    %v212 = vsel %vm200, %v194, %v211
    %v213 = vsel %vm199, %v210, %v212
    %v214 = vshll.u32 %v174, 8
    %v215 = vmul.u32.u64.compose %v214, %v213
    %v216 = vextract.low.u32 %v215
    %v217 = vextract.high.u32 %v215
    %v218 = vmul.u32.u64.compose %v214, %v209
    %v219 = vextract.low.u32 %v218
    %v220 = vextract.high.u32 %v218
    %v221 = vmul.u32 %v214, %v205
    %v222 = vadd.s32 %v217, %v219
    %vm223 = vc.u32 %v217, %v219
    %v224 = vadd.s32 %v220, 1
    %v225 = vsel %vm223, %v224, %v220
    %v226 = vadd.s32 %v221, %v225
    %v227 = vadd.s32 %v226, 536870912
    %v228 = vshrl.u32 %v227, 30
    %v229 = vshll.u32 %v228, 30
    %v230 = vsub.s32 %v226, %v229
    %vm231 = vcmp.lt.s32.totalorder %v230, 0
    %v232 = vsub.s32 0, %v230
    %v233 = vsel %vm231, %v232, %v230
    %v234 = vclz %v233
    %v235 = vsub.s32 %v234, 2
    %vm236 = vcmp.gt.s32.totalorder 0, %v235
    %v237 = vsel %vm236, 0, %v235
    %v238 = vsub.s32 32, %v237
    %v239 = vshll.u32 %v230, %v237
    %v240 = vshrl.u32 %v222, %v238
    %v241 = vor.u32 %v239, %v240
    %v242 = vsub.s32 4294967266, %v237
    %v243 = vadd.s32 %v242, 127
    %v244 = vshll.u32 %v243, 23
    %v245 = vor.u32 4788187, %v244
    %v246 = vand.u32 2147483647, %v245
    %v248 = vcvt.s32.f32 %v241
    %v249 = vmul.f32 %v248, %v246
    %v250 = vxor.u32 %v249, 2147483648
    %v251 = vsel %vm168, %v250, %v249
    %v252 = vsub.s32 4, %v228
    %v253 = vsel %vm168, %v252, %v228
    %v254 = vsel %vm167, %v161, %v251
    %v255 = vsel %vm167, 0, %v253
    %v256 = vcosq.f32.pop %v254
    %v257 = vsinq.f32.pop %v254
    %vm258 = vweird.f32 %v161
    %v259 = vadd.s32 %v255, 3
    %v260 = vand.u32 %v259, 3
    %vm261 = vcmp.lt.s32.totalorder %v260, 2
    %vm262 = vcmp.eq.s32.totalorder %v260, 0
    %v263 = vxor.u32 %v257, 2147483648
    %v264 = vsel %vm262, %v256, %v263
    %vm265 = vcmp.eq.s32.totalorder %v260, 2
    %v266 = vxor.u32 %v256, 2147483648
    %v267 = vsel %vm265, %v266, %v257
    %v268 = vsel %vm261, %v264, %v267
    %v269 = vsel %vm258, nan, %v268
    %v270 = vand.u32 2147483647, %v162
    %vm271 = vcmp.le.f32.partialorder %v270, 0.7853982
    %vm272 = vcmp.lt.s32.totalorder %v162, 0
    %v273 = vand.u32 %v162, 2139095040
    %v274 = vshrl.u32 %v273, 23
    %v275 = vsub.s32 %v274, 127
    %v276 = vand.u32 2147483647, %v162
    %v277 = vand.u32 %v276, 8388607
    %v278 = vor.u32 %v277, 8388608
    %v279 = vsub.s32 0, %v278
    %v280 = vadd.s32 %v275, 1
    %vm281 = vcmp.gt.s32.totalorder %v280, 0
    %v282 = vsel %vm281, %v280, 0
    %v283 = vshrl.u32 %v282, 5
    %v284 = vand.u32 %v282, 31
    %v285 = vsub.s32 32, %v284
    %v286 = vshrl.u32 683565275, %v285
    %v287 = vshll.u32 683565275, %v284
    %v288 = vshrl.u32 2475754826, %v285
    %v289 = vor.u32 %v287, %v288
    %v290 = vshll.u32 2475754826, %v284
    %v291 = vshrl.u32 2131351028, %v285
    %v292 = vor.u32 %v290, %v291
    %v293 = vshll.u32 2131351028, %v284
    %v294 = vshrl.u32 2102212464, %v285
    %v295 = vor.u32 %v293, %v294
    %v296 = vshll.u32 2102212464, %v284
    %v297 = vshrl.u32 920167782, %v285
    %v298 = vor.u32 %v296, %v297
    %v299 = vshll.u32 920167782, %v284
    %v300 = vshrl.u32 1326507024, %v285
    %v301 = vor.u32 %v299, %v300
    %vm302 = vcmp.lt.s32.totalorder %v283, 1
    %vm303 = vcmp.lt.s32.totalorder %v283, 2
    %vm304 = vcmp.lt.s32.totalorder %v283, 3
    %vm305 = vcmp.lt.s32.totalorder %v283, 4
    %v306 = vsel %vm302, %v286, %v289
    %v307 = vsel %vm305, %v295, 2102212464
    %v308 = vsel %vm304, %v292, %v307
    %v309 = vsel %vm303, %v306, %v308
    %v310 = vsel %vm302, %v289, %v292
    %v311 = vsel %vm305, %v298, 920167782
    %v312 = vsel %vm304, %v295, %v311
    %v313 = vsel %vm303, %v310, %v312
    %v314 = vsel %vm302, %v292, %v295
    %v315 = vsel %vm305, %v301, 1326507024
    %v316 = vsel %vm304, %v298, %v315
    %v317 = vsel %vm303, %v314, %v316
    %v318 = vshll.u32 %v278, 8
    %v319 = vmul.u32.u64.compose %v318, %v317
    %v320 = vextract.low.u32 %v319
    %v321 = vextract.high.u32 %v319
    %v322 = vmul.u32.u64.compose %v318, %v313
    %v323 = vextract.low.u32 %v322
    %v324 = vextract.high.u32 %v322
    %v325 = vmul.u32 %v318, %v309
    %v326 = vadd.s32 %v321, %v323
    %vm327 = vc.u32 %v321, %v323
    %v328 = vadd.s32 %v324, 1
    %v329 = vsel %vm327, %v328, %v324
    %v330 = vadd.s32 %v325, %v329
    %v331 = vadd.s32 %v330, 536870912
    %v332 = vshrl.u32 %v331, 30
    %v333 = vshll.u32 %v332, 30
    %v334 = vsub.s32 %v330, %v333
    %vm335 = vcmp.lt.s32.totalorder %v334, 0
    %v336 = vsub.s32 0, %v334
    %v337 = vsel %vm335, %v336, %v334
    %v338 = vclz %v337
    %v339 = vsub.s32 %v338, 2
    %vm340 = vcmp.gt.s32.totalorder 0, %v339
    %v341 = vsel %vm340, 0, %v339
    %v342 = vsub.s32 32, %v341
    %v343 = vshll.u32 %v334, %v341
    %v344 = vshrl.u32 %v326, %v342
    %v345 = vor.u32 %v343, %v344
    %v346 = vsub.s32 4294967266, %v341
    %v347 = vadd.s32 %v346, 127
    %v348 = vshll.u32 %v347, 23
    %v349 = vor.u32 4788187, %v348
    %v350 = vand.u32 2147483647, %v349
    %v352 = vcvt.s32.f32 %v345
    %v353 = vmul.f32 %v352, %v350
    %v354 = vxor.u32 %v353, 2147483648
    %v355 = vsel %vm272, %v354, %v353
    %v356 = vsub.s32 4, %v332
    %v357 = vsel %vm272, %v356, %v332
    %v358 = vsel %vm271, %v162, %v355
    %v359 = vsel %vm271, 0, %v357
    %v360 = vcosq.f32.pop %v358
    %v361 = vsinq.f32.pop %v358
    %vm362 = vweird.f32 %v162
    %v363 = vadd.s32 %v359, 3
    %v364 = vand.u32 %v363, 3
    %vm365 = vcmp.lt.s32.totalorder %v364, 2
    %vm366 = vcmp.eq.s32.totalorder %v364, 0
    %v367 = vxor.u32 %v361, 2147483648
    %v368 = vsel %vm366, %v360, %v367
    %vm369 = vcmp.eq.s32.totalorder %v364, 2
    %v370 = vxor.u32 %v360, 2147483648
    %v371 = vsel %vm369, %v370, %v361
    %v372 = vsel %vm365, %v368, %v371
    %v373 = vsel %vm362, nan, %v372
    %v374 = vand.u32 2147483647, %v163
    %vm375 = vcmp.le.f32.partialorder %v374, 0.7853982
    %vm376 = vcmp.lt.s32.totalorder %v163, 0
    %v377 = vand.u32 %v163, 2139095040
    %v378 = vshrl.u32 %v377, 23
    %v379 = vsub.s32 %v378, 127
    %v380 = vand.u32 2147483647, %v163
    %v381 = vand.u32 %v380, 8388607
    %v382 = vor.u32 %v381, 8388608
    %v383 = vsub.s32 0, %v382
    %v384 = vadd.s32 %v379, 1
    %vm385 = vcmp.gt.s32.totalorder %v384, 0
    %v386 = vsel %vm385, %v384, 0
    %v387 = vshrl.u32 %v386, 5
    %v388 = vand.u32 %v386, 31
    %v389 = vsub.s32 32, %v388
    %v390 = vshrl.u32 683565275, %v389
    %v391 = vshll.u32 683565275, %v388
    %v392 = vshrl.u32 2475754826, %v389
    %v393 = vor.u32 %v391, %v392
    %v394 = vshll.u32 2475754826, %v388
    %v395 = vshrl.u32 2131351028, %v389
    %v396 = vor.u32 %v394, %v395
    %v397 = vshll.u32 2131351028, %v388
    %v398 = vshrl.u32 2102212464, %v389
    %v399 = vor.u32 %v397, %v398
    %v400 = vshll.u32 2102212464, %v388
    %v401 = vshrl.u32 920167782, %v389
    %v402 = vor.u32 %v400, %v401
    %v403 = vshll.u32 920167782, %v388
    %v404 = vshrl.u32 1326507024, %v389
    %v405 = vor.u32 %v403, %v404
    %vm406 = vcmp.lt.s32.totalorder %v387, 1
    %vm407 = vcmp.lt.s32.totalorder %v387, 2
    %vm408 = vcmp.lt.s32.totalorder %v387, 3
    %vm409 = vcmp.lt.s32.totalorder %v387, 4
    %v410 = vsel %vm406, %v390, %v393
    %v411 = vsel %vm409, %v399, 2102212464
    %v412 = vsel %vm408, %v396, %v411
    %v413 = vsel %vm407, %v410, %v412
    %v414 = vsel %vm406, %v393, %v396
    %v415 = vsel %vm409, %v402, 920167782
    %v416 = vsel %vm408, %v399, %v415
    %v417 = vsel %vm407, %v414, %v416
    %v418 = vsel %vm406, %v396, %v399
    %v419 = vsel %vm409, %v405, 1326507024
    %v420 = vsel %vm408, %v402, %v419
    %v421 = vsel %vm407, %v418, %v420
    %v422 = vshll.u32 %v382, 8
    %v423 = vmul.u32.u64.compose %v422, %v421
    %v424 = vextract.low.u32 %v423
    %v425 = vextract.high.u32 %v423
    %v426 = vmul.u32.u64.compose %v422, %v417
    %v427 = vextract.low.u32 %v426
    %v428 = vextract.high.u32 %v426
    %v429 = vmul.u32 %v422, %v413
    %v430 = vadd.s32 %v425, %v427
    %vm431 = vc.u32 %v425, %v427
    %v432 = vadd.s32 %v428, 1
    %v433 = vsel %vm431, %v432, %v428
    %v434 = vadd.s32 %v429, %v433
    %v435 = vadd.s32 %v434, 536870912
    %v436 = vshrl.u32 %v435, 30
    %v437 = vshll.u32 %v436, 30
    %v438 = vsub.s32 %v434, %v437
    %vm439 = vcmp.lt.s32.totalorder %v438, 0
    %v440 = vsub.s32 0, %v438
    %v441 = vsel %vm439, %v440, %v438
    %v442 = vclz %v441
    %v443 = vsub.s32 %v442, 2
    %vm444 = vcmp.gt.s32.totalorder 0, %v443
    %v445 = vsel %vm444, 0, %v443
    %v446 = vsub.s32 32, %v445
    %v447 = vshll.u32 %v438, %v445
    %v448 = vshrl.u32 %v430, %v446
    %v449 = vor.u32 %v447, %v448
    %v450 = vsub.s32 4294967266, %v445
    %v451 = vadd.s32 %v450, 127
    %v452 = vshll.u32 %v451, 23
    %v453 = vor.u32 4788187, %v452
    %v454 = vand.u32 2147483647, %v453
    %v456 = vcvt.s32.f32 %v449
    %v457 = vmul.f32 %v456, %v454
    %v458 = vxor.u32 %v457, 2147483648
    %v459 = vsel %vm376, %v458, %v457
    %v460 = vsub.s32 4, %v436
    %v461 = vsel %vm376, %v460, %v436
    %v462 = vsel %vm375, %v163, %v459
    %v463 = vsel %vm375, 0, %v461
    %v464 = vcosq.f32.pop %v462
    %v465 = vsinq.f32.pop %v462
    %vm466 = vweird.f32 %v163
    %v467 = vadd.s32 %v463, 3
    %v468 = vand.u32 %v467, 3
    %vm469 = vcmp.lt.s32.totalorder %v468, 2
    %vm470 = vcmp.eq.s32.totalorder %v468, 0
    %v471 = vxor.u32 %v465, 2147483648
    %v472 = vsel %vm470, %v464, %v471
    %vm473 = vcmp.eq.s32.totalorder %v468, 2
    %v474 = vxor.u32 %v464, 2147483648
    %v475 = vsel %vm473, %v474, %v465
    %v476 = vsel %vm469, %v472, %v475
    %v477 = vsel %vm466, nan, %v476
    %v478 = vand.u32 2147483647, %v164
    %vm479 = vcmp.le.f32.partialorder %v478, 0.7853982
    %vm480 = vcmp.lt.s32.totalorder %v164, 0
    %v481 = vand.u32 %v164, 2139095040
    %v482 = vshrl.u32 %v481, 23
    %v483 = vsub.s32 %v482, 127
    %v484 = vand.u32 2147483647, %v164
    %v485 = vand.u32 %v484, 8388607
    %v486 = vor.u32 %v485, 8388608
    %v487 = vsub.s32 0, %v486
    %v488 = vadd.s32 %v483, 1
    %vm489 = vcmp.gt.s32.totalorder %v488, 0
    %v490 = vsel %vm489, %v488, 0
    %v491 = vshrl.u32 %v490, 5
    %v492 = vand.u32 %v490, 31
    %v493 = vsub.s32 32, %v492
    %v494 = vshrl.u32 683565275, %v493
    %v495 = vshll.u32 683565275, %v492
    %v496 = vshrl.u32 2475754826, %v493
    %v497 = vor.u32 %v495, %v496
    %v498 = vshll.u32 2475754826, %v492
    %v499 = vshrl.u32 2131351028, %v493
    %v500 = vor.u32 %v498, %v499
    %v501 = vshll.u32 2131351028, %v492
    %v502 = vshrl.u32 2102212464, %v493
    %v503 = vor.u32 %v501, %v502
    %v504 = vshll.u32 2102212464, %v492
    %v505 = vshrl.u32 920167782, %v493
    %v506 = vor.u32 %v504, %v505
    %v507 = vshll.u32 920167782, %v492
    %v508 = vshrl.u32 1326507024, %v493
    %v509 = vor.u32 %v507, %v508
    %vm510 = vcmp.lt.s32.totalorder %v491, 1
    %vm511 = vcmp.lt.s32.totalorder %v491, 2
    %vm512 = vcmp.lt.s32.totalorder %v491, 3
    %vm513 = vcmp.lt.s32.totalorder %v491, 4
    %v514 = vsel %vm510, %v494, %v497
    %v515 = vsel %vm513, %v503, 2102212464
    %v516 = vsel %vm512, %v500, %v515
    %v517 = vsel %vm511, %v514, %v516
    %v518 = vsel %vm510, %v497, %v500
    %v519 = vsel %vm513, %v506, 920167782
    %v520 = vsel %vm512, %v503, %v519
    %v521 = vsel %vm511, %v518, %v520
    %v522 = vsel %vm510, %v500, %v503
    %v523 = vsel %vm513, %v509, 1326507024
    %v524 = vsel %vm512, %v506, %v523
    %v525 = vsel %vm511, %v522, %v524
    %v526 = vshll.u32 %v486, 8
    %v527 = vmul.u32.u64.compose %v526, %v525
    %v528 = vextract.low.u32 %v527
    %v529 = vextract.high.u32 %v527
    %v530 = vmul.u32.u64.compose %v526, %v521
    %v531 = vextract.low.u32 %v530
    %v532 = vextract.high.u32 %v530
    %v533 = vmul.u32 %v526, %v517
    %v534 = vadd.s32 %v529, %v531
    %vm535 = vc.u32 %v529, %v531
    %v536 = vadd.s32 %v532, 1
    %v537 = vsel %vm535, %v536, %v532
    %v538 = vadd.s32 %v533, %v537
    %v539 = vadd.s32 %v538, 536870912
    %v540 = vshrl.u32 %v539, 30
    %v541 = vshll.u32 %v540, 30
    %v542 = vsub.s32 %v538, %v541
    %vm543 = vcmp.lt.s32.totalorder %v542, 0
    %v544 = vsub.s32 0, %v542
    %v545 = vsel %vm543, %v544, %v542
    %v546 = vclz %v545
    %v547 = vsub.s32 %v546, 2
    %vm548 = vcmp.gt.s32.totalorder 0, %v547
    %v549 = vsel %vm548, 0, %v547
    %v550 = vsub.s32 32, %v549
    %v551 = vshll.u32 %v542, %v549
    %v552 = vshrl.u32 %v534, %v550
    %v553 = vor.u32 %v551, %v552
    %v554 = vsub.s32 4294967266, %v549
    %v555 = vadd.s32 %v554, 127
    %v556 = vshll.u32 %v555, 23
    %v557 = vor.u32 4788187, %v556
    %v558 = vand.u32 2147483647, %v557
    %v560 = vcvt.s32.f32 %v553
    %v561 = vmul.f32 %v560, %v558
    %v562 = vxor.u32 %v561, 2147483648
    %v563 = vsel %vm480, %v562, %v561
    %v564 = vsub.s32 4, %v540
    %v565 = vsel %vm480, %v564, %v540
    %v566 = vsel %vm479, %v164, %v563
    %v567 = vsel %vm479, 0, %v565
    %v568 = vcosq.f32.pop %v566
    %v569 = vsinq.f32.pop %v566
    %vm570 = vweird.f32 %v164
    %v571 = vadd.s32 %v567, 3
    %v572 = vand.u32 %v571, 3
    %vm573 = vcmp.lt.s32.totalorder %v572, 2
    %vm574 = vcmp.eq.s32.totalorder %v572, 0
    %v575 = vxor.u32 %v569, 2147483648
    %v576 = vsel %vm574, %v568, %v575
    %vm577 = vcmp.eq.s32.totalorder %v572, 2
    %v578 = vxor.u32 %v568, 2147483648
    %v579 = vsel %vm577, %v578, %v569
    %v580 = vsel %vm573, %v576, %v579
    %v581 = vsel %vm570, nan, %v580
    %v582 = vand.u32 2147483647, %v165
    %vm583 = vcmp.le.f32.partialorder %v582, 0.7853982
    %vm584 = vcmp.lt.s32.totalorder %v165, 0
    %v585 = vand.u32 %v165, 2139095040
    %v586 = vshrl.u32 %v585, 23
    %v587 = vsub.s32 %v586, 127
    %v588 = vand.u32 2147483647, %v165
    %v589 = vand.u32 %v588, 8388607
    %v590 = vor.u32 %v589, 8388608
    %v591 = vsub.s32 0, %v590
    %v592 = vadd.s32 %v587, 1
    %vm593 = vcmp.gt.s32.totalorder %v592, 0
    %v594 = vsel %vm593, %v592, 0
    %v595 = vshrl.u32 %v594, 5
    %v596 = vand.u32 %v594, 31
    %v597 = vsub.s32 32, %v596
    %v598 = vshrl.u32 683565275, %v597
    %v599 = vshll.u32 683565275, %v596
    %v600 = vshrl.u32 2475754826, %v597
    %v601 = vor.u32 %v599, %v600
    %v602 = vshll.u32 2475754826, %v596
    %v603 = vshrl.u32 2131351028, %v597
    %v604 = vor.u32 %v602, %v603
    %v605 = vshll.u32 2131351028, %v596
    %v606 = vshrl.u32 2102212464, %v597
    %v607 = vor.u32 %v605, %v606
    %v608 = vshll.u32 2102212464, %v596
    %v609 = vshrl.u32 920167782, %v597
    %v610 = vor.u32 %v608, %v609
    %v611 = vshll.u32 920167782, %v596
    %v612 = vshrl.u32 1326507024, %v597
    %v613 = vor.u32 %v611, %v612
    %vm614 = vcmp.lt.s32.totalorder %v595, 1
    %vm615 = vcmp.lt.s32.totalorder %v595, 2
    %vm616 = vcmp.lt.s32.totalorder %v595, 3
    %vm617 = vcmp.lt.s32.totalorder %v595, 4
    %v618 = vsel %vm614, %v598, %v601
    %v619 = vsel %vm617, %v607, 2102212464
    %v620 = vsel %vm616, %v604, %v619
    %v621 = vsel %vm615, %v618, %v620
    %v622 = vsel %vm614, %v601, %v604
    %v623 = vsel %vm617, %v610, 920167782
    %v624 = vsel %vm616, %v607, %v623
    %v625 = vsel %vm615, %v622, %v624
    %v626 = vsel %vm614, %v604, %v607
    %v627 = vsel %vm617, %v613, 1326507024
    %v628 = vsel %vm616, %v610, %v627
    %v629 = vsel %vm615, %v626, %v628
    %v630 = vshll.u32 %v590, 8
    %v631 = vmul.u32.u64.compose %v630, %v629
    %v632 = vextract.low.u32 %v631
    %v633 = vextract.high.u32 %v631
    %v634 = vmul.u32.u64.compose %v630, %v625
    %v635 = vextract.low.u32 %v634
    %v636 = vextract.high.u32 %v634
    %v637 = vmul.u32 %v630, %v621
    %v638 = vadd.s32 %v633, %v635
    %vm639 = vc.u32 %v633, %v635
    %v640 = vadd.s32 %v636, 1
    %v641 = vsel %vm639, %v640, %v636
    %v642 = vadd.s32 %v637, %v641
    %v643 = vadd.s32 %v642, 536870912
    %v644 = vshrl.u32 %v643, 30
    %v645 = vshll.u32 %v644, 30
    %v646 = vsub.s32 %v642, %v645
    %vm647 = vcmp.lt.s32.totalorder %v646, 0
    %v648 = vsub.s32 0, %v646
    %v649 = vsel %vm647, %v648, %v646
    %v650 = vclz %v649
    %v651 = vsub.s32 %v650, 2
    %vm652 = vcmp.gt.s32.totalorder 0, %v651
    %v653 = vsel %vm652, 0, %v651
    %v654 = vsub.s32 32, %v653
    %v655 = vshll.u32 %v646, %v653
    %v656 = vshrl.u32 %v638, %v654
    %v657 = vor.u32 %v655, %v656
    %v658 = vsub.s32 4294967266, %v653
    %v659 = vadd.s32 %v658, 127
    %v660 = vshll.u32 %v659, 23
    %v661 = vor.u32 4788187, %v660
    %v662 = vand.u32 2147483647, %v661
    %v664 = vcvt.s32.f32 %v657
    %v665 = vmul.f32 %v664, %v662
    %v666 = vxor.u32 %v665, 2147483648
    %v667 = vsel %vm584, %v666, %v665
    %v668 = vsub.s32 4, %v644
    %v669 = vsel %vm584, %v668, %v644
    %v670 = vsel %vm583, %v165, %v667
    %v671 = vsel %vm583, 0, %v669
    %v672 = vcosq.f32.pop %v670
    %v673 = vsinq.f32.pop %v670
    %vm674 = vweird.f32 %v165
    %v675 = vadd.s32 %v671, 3
    %v676 = vand.u32 %v675, 3
    %vm677 = vcmp.lt.s32.totalorder %v676, 2
    %vm678 = vcmp.eq.s32.totalorder %v676, 0
    %v679 = vxor.u32 %v673, 2147483648
    %v680 = vsel %vm678, %v672, %v679
    %vm681 = vcmp.eq.s32.totalorder %v676, 2
    %v682 = vxor.u32 %v672, 2147483648
    %v683 = vsel %vm681, %v682, %v673
    %v684 = vsel %vm677, %v680, %v683
    %v685 = vsel %vm674, nan, %v684
    %686 = vst [vmem:[#allocation7] sm:$0xff] %v269
    %687 = vst [vmem:[#allocation7 + $0x8] sm:$0xff] %v373
    %688 = vst [vmem:[#allocation7 + $0x10] sm:$0xff] %v477
    %689 = vst [vmem:[#allocation7 + $0x18] sm:$0xff] %v581
    %690 = vst [vmem:[#allocation7 + $0x20] sm:$0xff] %v685
    // Predicated region
    $region22: #{tpu_custom_call.1} parent=1 // pred_check
      _
    $region23: #{tpu_custom_call.1} parent=1 // pred_check_branch
      %692 = sbr.rel (0) target = $region25
    $region24: #{tpu_custom_call.1} parent=1 // pred_region
      %s694 = ssub.s32 640, 640
      %695 = vsyncadd [#allocation4], %s694
      %s696 = sshll.u32 [#allocation7], 4
      %s697 = int_to_ptr.vmem [resolvable:$true] %s696
      %702 = dma.vmem_to_hbm [thread:$0]  %s697, 640, %s3, [#allocation4], 128, 128, 8
    $region25: #{tpu_custom_call.1} parent=1 // pred_fallthru
      _
    // Predicated region
    $region26: #{tpu_custom_call.1} parent=1 // pred_check
      _
    $region27: #{tpu_custom_call.1} parent=1 // pred_check_branch
      %704 = sbr.rel (0) target = $region29
    $region28: #{tpu_custom_call.1} parent=1 // pred_region
      %705 = dma.done [#allocation4], 640
    $region29: #{tpu_custom_call.1} parent=1 // pred_fallthru
      _
    %706 = vsyncpa [#allocation3], 1
    %707 = vsyncpa [#allocation6], 1
    %708 = vsyncpa [#allocation4], 1

</llo_original>
